<compile_context>
chip_gen: v6e
topology: v6e:2x2x1
jax: 0.10.0
libtpu: 0.0.40
codegen_flags: <defaults>
</compile_context>

<pallas_src>
import jax
import jax.numpy as jnp
from jax import lax
from jax.experimental import pallas as pl
from jax.experimental.pallas import tpu as pltpu


def attention_kernel(len_ref,        # (TB, 1) int32  valid lengths
                     x_ref,          # (TB, S, D) f32 sequences
                     wl_ref,         # (D, A)  f32
                     bl_ref,         # (1, A)  f32
                     wc_ref,         # (1, A)  f32
                     out_ref,        # (TB, D) f32 weighted sum
                     score_ref):     # (TB, S) f32 attention scores
    TB, S, D = x_ref.shape
    A = wl_ref.shape[1]

    x3 = x_ref[...]                                   # (TB, S, D)
    x2 = x3.reshape(TB * S, D)                        # leading-dim merge (layout-free)

    # Layer 1: tanh(x @ Wl + bl) -- one MXU matmul for all TB sequences.
    h = jnp.tanh(
        jnp.dot(x2, wl_ref[...], preferred_element_type=jnp.float32)
        + bl_ref[...])                                # (TB*S, A)

    # Context projection A -> 1 as VPU multiply + lane reduce, lane-dense result.
    # bc omitted: softmax shift-invariance makes it dead math.
    att = jnp.sum(h.reshape(TB, S, A) * wc_ref[...], axis=-1)     # (TB, S)

    # Masked, numerically-stable softmax over the sequence (lane) axis.
    sl = len_ref[...]                                             # (TB, 1) int32
    idx = lax.broadcasted_iota(jnp.int32, (TB, S), 1)
    valid = idx < sl                                              # (TB, S)
    att = jnp.where(valid, att, jnp.float32(-1e30))
    m = jnp.max(att, axis=-1, keepdims=True)                      # (TB, 1)
    e = jnp.where(valid, jnp.exp(att - m), 0.0)                   # (TB, S)
    denom = jnp.sum(e, axis=-1, keepdims=True)                    # (TB, 1)
    score = e * pl.reciprocal(denom, approx=False)                # (TB, S)
    score_ref[...] = score

    # Weighted sum over S: batched (1,S)@(S,D) matmul (flash-attention pattern).
    out3 = jnp.einsum('bqs,bsd->bqd', score[:, None, :], x3,
                      preferred_element_type=jnp.float32)         # (TB, 1, D)
    out_ref[...] = out3.reshape(TB, D).astype(out_ref.dtype)


def _choose_tb(B, S, D, itemsize=4, target_rows=512,
               vmem_budget_bytes=16 * 1024 * 1024):
    """Sequences per grid step.  Multiple of 8 (sublane constraint on the
    (TB, D)/(TB, S) output blocks).  Grow until the matmul LHS has enough
    rows, the double-buffered seq block would exceed the VMEM budget, or the
    grid would collapse below 2 steps (keep both v7x TensorCores busy)."""
    tb = 8
    while True:
        nxt = tb * 2
        rows = tb * S
        need_next = 2 * nxt * S * D * itemsize        # double-buffered input block
        if rows >= target_rows or need_next > vmem_budget_bytes:
            break
        if -(-B // nxt) < 2:                          # ceil(B / nxt) -> grid steps
            break
        tb = nxt
    return tb


def attention_with_context(seq_enc, wl, bl, wc, bc=None, seq_len=None, tb=None):
    """seq_enc (B,S,D); wl (D,A); bl (A,); wc (A,); bc scalar (ignored, dead
    under softmax); seq_len (B,) int or None.  Returns (out (B,D), score (B,S))."""
    B, S, D = seq_enc.shape
    A = wl.shape[1]
    del bc  # softmax is shift-invariant: the context bias cancels exactly.

    if seq_len is None:
        seq_len = jnp.full((B,), S, dtype=jnp.int32)   # full length == plain softmax
    seq_len = seq_len.astype(jnp.int32)

    if tb is None:
        tb = _choose_tb(B, S, D)
    Bp = -(-B // tb) * tb                              # pad batch to a TB multiple
    if Bp != B:
        seq_enc = jnp.pad(seq_enc, ((0, Bp - B), (0, 0), (0, 0)))
        seq_len = jnp.pad(seq_len, (0, Bp - B), constant_values=S)  # avoid 0/0 rows

    seq_len2 = seq_len.reshape(Bp, 1)
    wl2 = wl.astype(jnp.float32)
    bl2 = bl.reshape(1, A).astype(jnp.float32)
    wc2 = wc.reshape(1, A).astype(jnp.float32)

    grid = (Bp // tb,)

    # Conservative VMEM estimate: double-buffered seq/out/score/len blocks plus
    # the (re-used) weight blocks.  v5e's default scoped limit is only 16 MiB.
    vmem_need = (2 * tb * S * D * 4 + 2 * tb * D * 4 + 2 * tb * S * 4
                 + 2 * tb * 4 + 2 * (D * A * 4 + 2 * A * 4))
    vmem_limit = int(min(max(2 * vmem_need, 16 * 1024 * 1024), 48 * 1024 * 1024))

    out, score = pl.pallas_call(
        attention_kernel,
        out_shape=(
            jax.ShapeDtypeStruct((Bp, D), seq_enc.dtype),   # weighted sum
            jax.ShapeDtypeStruct((Bp, S), jnp.float32),     # attention scores
        ),
        grid_spec=pltpu.PrefetchScalarGridSpec(
            num_scalar_prefetch=0,
            grid=grid,
            in_specs=[
                pl.BlockSpec((tb, 1), lambda g: (g, 0)),        # seq_len
                pl.BlockSpec((tb, S, D), lambda g: (g, 0, 0)),  # seq_enc block
                pl.BlockSpec((D, A), lambda g: (0, 0)),         # Wl (constant index)
                pl.BlockSpec((1, A), lambda g: (0, 0)),         # bl (constant index)
                pl.BlockSpec((1, A), lambda g: (0, 0)),         # wc (constant index)
            ],
            out_specs=(
                pl.BlockSpec((tb, D), lambda g: (g, 0)),
                pl.BlockSpec((tb, S), lambda g: (g, 0)),
            ),
        ),
        compiler_params=pltpu.CompilerParams(
            dimension_semantics=("parallel",),          # megacore-shardable on v7x
            vmem_limit_bytes=vmem_limit),
    )(seq_len2, seq_enc.astype(jnp.float32), wl2, bl2, wc2)

    return out[:B], score[:B]


def reference(seq_enc, wl, bl, wc, bc, seq_len=None):
    """Pure-JAX reference mirroring the PyTorch forward exactly (incl. bc)."""
    hp = lax.Precision.HIGHEST
    att = jnp.tanh(jnp.einsum('bsd,da->bsa', seq_enc, wl, precision=hp) + bl)
    att = jnp.einsum('bsa,a->bs', att, wc, precision=hp) + bc
    if seq_len is None:
        score = jax.nn.softmax(att, axis=-1)
    else:
        S = seq_enc.shape[1]
        mask = (jnp.arange(S)[None, :] < seq_len[:, None]).astype(att.dtype)
        sc = jnp.exp(att) * mask
        score = sc / jnp.sum(sc, axis=-1, keepdims=True)
    out = jnp.sum(score[..., None] * seq_enc, axis=1)
    return out, score


if __name__ == "__main__":
    # num_seq, pad_seq_dim, input_size, attention_size
    B, S, D, A = 16, 16, 128, 128

    key = jax.random.PRNGKey(0)
    k1, k2, k3, k4, k5, k6 = jax.random.split(key, 6)

    seq_enc = jax.random.normal(k1, (B, S, D), dtype=jnp.float32)
    seq_len = jax.random.randint(k2, (B,), 1, S + 1, dtype=jnp.int32)

    # nn.Linear stores (out, in); we keep the transposed (in, out) layout the
    # kernel consumes directly.  Xavier-ish scaling.
    wl = (1.0 / jnp.sqrt(D)) * jax.random.normal(k3, (D, A), jnp.float32)
    bl = 0.1 * jax.random.normal(k4, (A,), jnp.float32)
    wc = (1.0 / jnp.sqrt(A)) * jax.random.normal(k5, (A,), jnp.float32)
    bc = 0.1 * jax.random.normal(k6, (), jnp.float32)

    # Masked-softmax path.
    out, score = attention_with_context(seq_enc, wl, bl, wc, bc, seq_len)
    out, score = jax.block_until_ready((out, score))
    ref_out, ref_score = reference(seq_enc, wl, bl, wc, bc, seq_len)
    assert out.shape == (B, D) and score.shape == (B, S)
    assert jnp.allclose(score, ref_score, atol=1e-4, rtol=1e-4), "score mismatch"
    assert jnp.allclose(out, ref_out, atol=1e-4, rtol=1e-4), "output mismatch"

    # seq_len=None (plain softmax) path.
    out2, score2 = attention_with_context(seq_enc, wl, bl, wc, bc, None)
    out2, score2 = jax.block_until_ready((out2, score2))
    ref_out2, ref_score2 = reference(seq_enc, wl, bl, wc, bc, None)
    assert jnp.allclose(score2, ref_score2, atol=1e-4, rtol=1e-4)
    assert jnp.allclose(out2, ref_out2, atol=1e-4, rtol=1e-4)

    # Ragged batch (B not a multiple of TB -> wrapper pads + slices).
    Br = 6
    out3, score3 = attention_with_context(seq_enc[:Br], wl, bl, wc, bc, seq_len[:Br])
    out3, score3 = jax.block_until_ready((out3, score3))
    ref_out3, ref_score3 = reference(seq_enc[:Br], wl, bl, wc, bc, seq_len[:Br])
    assert out3.shape == (Br, D) and score3.shape == (Br, S)
    assert jnp.allclose(score3, ref_score3, atol=1e-4, rtol=1e-4)
    assert jnp.allclose(out3, ref_out3, atol=1e-4, rtol=1e-4)

    print("KERNEL_OK")
</pallas_src>

<mosaic_0001>
module attributes {stable_mosaic.version = 11 : i64} {
  func.func @attention_kernel(%arg0: i32, %arg1: memref<8x1xi32, #tpu.memory_space<vmem>>, %arg2: memref<8x16x128xf32, #tpu.memory_space<vmem>>, %arg3: memref<128x128xf32, #tpu.memory_space<vmem>>, %arg4: memref<1x128xf32, #tpu.memory_space<vmem>>, %arg5: memref<1x128xf32, #tpu.memory_space<vmem>>, %arg6: memref<8x128xf32, #tpu.memory_space<vmem>>, %arg7: memref<8x16xf32, #tpu.memory_space<vmem>>) attributes {dimension_semantics = [#tpu.dimension_semantics<parallel>], iteration_bounds = array<i64: 2>, scalar_prefetch = 0 : i64, scratch_operands = 0 : i64, tpu.core_type = #tpu.core_type<tc>, window_params = [{transform_indices = @transform_0, window_bounds = array<i64: 8, 1>}, {transform_indices = @transform_1, window_bounds = array<i64: 8, 16, 128>}, {pipeline_mode = #tpu.pipeline_mode<synchronous>, transform_indices = @transform_2, window_bounds = array<i64: 128, 128>}, {pipeline_mode = #tpu.pipeline_mode<synchronous>, transform_indices = @transform_3, window_bounds = array<i64: 1, 128>}, {pipeline_mode = #tpu.pipeline_mode<synchronous>, transform_indices = @transform_4, window_bounds = array<i64: 1, 128>}, {transform_indices = @transform_5, window_bounds = array<i64: 8, 128>}, {transform_indices = @transform_6, window_bounds = array<i64: 8, 16>}]} {
    %c0 = arith.constant 0 : index
    %c0_0 = arith.constant 0 : index
    %c0_1 = arith.constant 0 : index
    %0 = vector.load %arg2[%c0, %c0_0, %c0_1] : memref<8x16x128xf32, #tpu.memory_space<vmem>>, vector<8x16x128xf32>
    %1 = vector.shape_cast %0 : vector<8x16x128xf32> to vector<128x128xf32>
    %c0_2 = arith.constant 0 : index
    %c0_3 = arith.constant 0 : index
    %2 = vector.load %arg3[%c0_2, %c0_3] : memref<128x128xf32, #tpu.memory_space<vmem>>, vector<128x128xf32>
    %cst = arith.constant dense<0.000000e+00> : vector<128x128xf32>
    %3 = tpu.matmul %1, %2, %cst {dimension_numbers = #tpu.dot_dimension_numbers<[1], [0], [0], [1], [0, 0, 1, 1], [], []>} : vector<128x128xf32>, vector<128x128xf32>, vector<128x128xf32> -> vector<128x128xf32>
    %c0_4 = arith.constant 0 : index
    %c0_5 = arith.constant 0 : index
    %4 = vector.load %arg4[%c0_4, %c0_5] : memref<1x128xf32, #tpu.memory_space<vmem>>, vector<1x128xf32>
    %5 = vector.broadcast %4 : vector<1x128xf32> to vector<128x128xf32>
    %6 = arith.addf %3, %5 : vector<128x128xf32>
    %7 = math.tanh %6 : vector<128x128xf32>
    %8 = vector.shape_cast %7 : vector<128x128xf32> to vector<8x16x128xf32>
    %c0_6 = arith.constant 0 : index
    %c0_7 = arith.constant 0 : index
    %9 = vector.load %arg5[%c0_6, %c0_7] : memref<1x128xf32, #tpu.memory_space<vmem>>, vector<1x128xf32>
    %10 = vector.shape_cast %9 : vector<1x128xf32> to vector<1x1x128xf32>
    %11 = vector.broadcast %10 : vector<1x1x128xf32> to vector<8x16x128xf32>
    %12 = arith.mulf %8, %11 : vector<8x16x128xf32>
    %cst_8 = arith.constant dense<0.000000e+00> : vector<8x16xf32>
    %13 = vector.multi_reduction <add>, %12, %cst_8 [2] : vector<8x16x128xf32> to vector<8x16xf32>
    %c0_9 = arith.constant 0 : index
    %c0_10 = arith.constant 0 : index
    %14 = vector.load %arg1[%c0_9, %c0_10] : memref<8x1xi32, #tpu.memory_space<vmem>>, vector<8x1xi32>
    %15 = tpu.iota {dimensions = array<i32: 1>} : vector<8x16xi32>
    %16 = vector.broadcast %14 : vector<8x1xi32> to vector<8x16xi32>
    %17 = arith.cmpi slt, %15, %16 : vector<8x16xi32>
    %cst_11 = arith.constant -1.000000e+30 : f32
    %18 = vector.broadcast %cst_11 : f32 to vector<8x16xf32>
    %19 = arith.select %17, %13, %18 : vector<8x16xi1>, vector<8x16xf32>
    %cst_12 = arith.constant dense<0xFF800000> : vector<8xf32>
    %20 = vector.multi_reduction <maximumf>, %19, %cst_12 [1] : vector<8x16xf32> to vector<8xf32>
    %21 = vector.shape_cast %20 : vector<8xf32> to vector<8x1xf32>
    %22 = vector.broadcast %21 : vector<8x1xf32> to vector<8x16xf32>
    %23 = arith.subf %19, %22 : vector<8x16xf32>
    %24 = math.exp %23 : vector<8x16xf32>
    %cst_13 = arith.constant 0.000000e+00 : f32
    %25 = vector.broadcast %cst_13 : f32 to vector<8x16xf32>
    %26 = arith.select %17, %24, %25 : vector<8x16xi1>, vector<8x16xf32>
    %cst_14 = arith.constant dense<0.000000e+00> : vector<8xf32>
    %27 = vector.multi_reduction <add>, %26, %cst_14 [1] : vector<8x16xf32> to vector<8xf32>
    %28 = vector.shape_cast %27 : vector<8xf32> to vector<8x1xf32>
    %29 = tpu.reciprocal %28 : vector<8x1xf32> -> vector<8x1xf32>
    %30 = vector.broadcast %29 : vector<8x1xf32> to vector<8x16xf32>
    %31 = arith.mulf %26, %30 : vector<8x16xf32>
    %c0_15 = arith.constant 0 : index
    %c0_16 = arith.constant 0 : index
    %32 = vector.load %arg7[%c0_15, %c0_16] : memref<8x16xf32, #tpu.memory_space<vmem>>, vector<8x16xf32>
    tpu.vector_store %arg7[%c0_15, %c0_16], %31 {strides = array<i32>} : memref<8x16xf32, #tpu.memory_space<vmem>>, vector<8x16xf32>,
    %33 = vector.shape_cast %31 : vector<8x16xf32> to vector<8x1x16xf32>
    "tpu.trace_start"() <{level = 10 : i32, message = "bqs,bsd->bqd"}> : () -> ()
    %cst_17 = arith.constant dense<0.000000e+00> : vector<8x1x128xf32>
    %34 = tpu.matmul %33, %0, %cst_17 {dimension_numbers = #tpu.dot_dimension_numbers<[2], [1], [1], [2], [0, 0, 0, 1, 1, 2], [0], [0]>} : vector<8x1x16xf32>, vector<8x16x128xf32>, vector<8x1x128xf32> -> vector<8x1x128xf32>
    "tpu.trace_stop"() : () -> ()
    %35 = vector.shape_cast %34 : vector<8x1x128xf32> to vector<8x128xf32>
    %c0_18 = arith.constant 0 : index
    %c0_19 = arith.constant 0 : index
    %36 = vector.load %arg6[%c0_18, %c0_19] : memref<8x128xf32, #tpu.memory_space<vmem>>, vector<8x128xf32>
    tpu.vector_store %arg6[%c0_18, %c0_19], %35 {strides = array<i32>} : memref<8x128xf32, #tpu.memory_space<vmem>>, vector<8x128xf32>,
    return
  }
  func.func @transform_0(%arg0: i32) -> (i32, i32) {
    %c0_i32 = arith.constant 0 : i32
    %c0_i32_0 = arith.constant 0 : i32
    return %arg0, %c0_i32 : i32, i32
  }
  func.func @transform_1(%arg0: i32) -> (i32, i32, i32) {
    %c0_i32 = arith.constant 0 : i32
    %c0_i32_0 = arith.constant 0 : i32
    %c0_i32_1 = arith.constant 0 : i32
    return %arg0, %c0_i32, %c0_i32_0 : i32, i32, i32
  }
  func.func @transform_2(%arg0: i32) -> (i32, i32) {
    %c0_i32 = arith.constant 0 : i32
    %c0_i32_0 = arith.constant 0 : i32
    %c0_i32_1 = arith.constant 0 : i32
    return %c0_i32, %c0_i32_0 : i32, i32
  }
  func.func @transform_3(%arg0: i32) -> (i32, i32) {
    %c0_i32 = arith.constant 0 : i32
    %c0_i32_0 = arith.constant 0 : i32
    %c0_i32_1 = arith.constant 0 : i32
    return %c0_i32, %c0_i32_0 : i32, i32
  }
  func.func @transform_4(%arg0: i32) -> (i32, i32) {
    %c0_i32 = arith.constant 0 : i32
    %c0_i32_0 = arith.constant 0 : i32
    %c0_i32_1 = arith.constant 0 : i32
    return %c0_i32, %c0_i32_0 : i32, i32
  }
  func.func @transform_5(%arg0: i32) -> (i32, i32) {
    %c0_i32 = arith.constant 0 : i32
    %c0_i32_0 = arith.constant 0 : i32
    return %arg0, %c0_i32 : i32, i32
  }
  func.func @transform_6(%arg0: i32) -> (i32, i32) {
    %c0_i32 = arith.constant 0 : i32
    %c0_i32_0 = arith.constant 0 : i32
    return %arg0, %c0_i32 : i32, i32
  }
}

</mosaic_0001>

<llo_original>
// kernel: tpu_custom_call.1
$region0: #{tpu_custom_call.1}
  #allocation0 [shape = 'u32[]', space=smem, size = 0x4, offset = 0x4, fixed_abs, tag = 'smem constant byte address 0x4 - core index']
  #allocation1 [shape = 'u32[144,128]{1,0:T(1,128)}', space=vmem, size = 0x12000, scoped, tag = 'internal scratch']
  %s0 = inlined_call_operand.vmem [shape: s32[16,1], index: 0, kind: input, shape index: {}]
  %s1 = inlined_call_operand.hbm [shape: f32[16,16,128], index: 1, kind: input, shape index: {}]
  %s2 = inlined_call_operand.hbm [shape: f32[128,128], index: 2, kind: input, shape index: {}]
  %s3 = inlined_call_operand.vmem [shape: f32[1,128], index: 3, kind: input, shape index: {}]
  %s4 = inlined_call_operand.vmem [shape: f32[1,128], index: 4, kind: input, shape index: {}]
  %s5 = inlined_call_operand.hbm [shape: f32[16,128], index: 5, kind: output, shape index: {0}]
  %s6 = inlined_call_operand.hbm [shape: f32[16,16], index: 6, kind: output, shape index: {1}]
  %7 = xla_tuple %s5, %s6
  %s8 = sld [smem:[#allocation0]]
  $region69: #{tpu_custom_call.1} parent=0
    _
  %s10 = ssub.s32 1, %s8
  %s11 = scalar_select 0, %s10, %s8
  $region1: #{tpu_custom_call.1} parent=0
    #allocation2 [shape = 'u8[131072]{0}', space=vmem, size = 0x20000, scoped, tag = 'input window, operand 1']
    #allocation3 [shape = 's32[2]{0}', space=sflag, size = 0x8, scoped, tag = 'scoped memory for tpu_custom_call.1']
    #allocation4 [shape = 's32[2]{0}', space=sflag, size = 0x8, scoped, tag = 'scoped memory for tpu_custom_call.1']
    #allocation5 [shape = 'u8[65536]{0}', space=vmem, size = 0x10000, scoped, tag = 'input window, operand 2, single buffered']
    #allocation6 [shape = 's32[1]{0}', space=sflag, size = 0x4, scoped, tag = 'scoped memory for tpu_custom_call.1']
    #allocation7 [shape = 'u8[8192]{0}', space=vmem, size = 0x2000, scoped, tag = 'output window, operand 0']
    #allocation8 [shape = 'u8[8192]{0}', space=vmem, size = 0x2000, scoped, tag = 'output window, operand 1']
    #allocation9 [shape = 's32[2]{0}', space=sflag, size = 0x8, scoped, tag = 'scoped memory for tpu_custom_call.1']
    %12 = vsyncpa [#allocation3], 0
    %s13 = scalar_lea.sflag [#allocation3], 1
    %14 = vsyncpa %s13, 0
    %15 = vsyncpa [#allocation6], 0
    %16 = vsyncpa [#allocation4], 0
    %s17 = scalar_lea.sflag [#allocation4], 1
    %18 = vsyncpa %s17, 0
    %19 = vsyncpa [#allocation9], 0
    %s20 = scalar_lea.sflag [#allocation9], 1
    %21 = vsyncpa %s20, 0
    loop: start=0, step=1, limit=4
    $region2: #{tpu_custom_call.1} parent=1 // loop_pre_header
      _
    $region3: #{tpu_custom_call.1} parent=1 // loop_header
      %s23 = sphi 0, %s27
      %p24 = scmp.ge.s32.totalorder %s23, 4
      %s33 = sphi 0, %s35
      %s36 = sphi 0, %s33
      %s37 = sphi 0, %s36
      %s53 = sphi 0, %s37
      %s59 = sphi 0, %s61
      %s62 = sphi 0, %s59
      %s63 = sphi 0, %s62
      %s79 = sphi 0, %s63
      %s83 = sphi 0, %s83
      %s85 = sphi 0, %s83
      %s86 = sphi 0, %s85
      %s100 = sphi 0, %s86
      %s104 = sphi 0, %s104
      %s106 = sphi 0, %s104
      %s107 = sphi 0, %s106
      %s121 = sphi 0, %s107
      %s125 = sphi 0, %s125
      %s127 = sphi 0, %s125
      %s128 = sphi 0, %s127
      %s142 = sphi 0, %s128
      %s148 = sphi 0, %s150
      %s151 = sphi 0, %s148
      %s152 = sphi 0, %s151
      %s168 = sphi 0, %s152
      %s174 = sphi 0, %s176
      %s177 = sphi 0, %s174
      %s178 = sphi 0, %s177
      %s194 = sphi 0, %s178
    $region4: #{tpu_custom_call.1} parent=1 // loop_header_branch
      %26 = sbr.rel (%p24) target = $region8
    $region5: #{tpu_custom_call.1} parent=1 // loop_body
      %s28 = ssub.s32 %s23, 1
      %s29 = ssub.s32 %s23, 2
      %s30 = sadd.s32 %s23, 1
      %s31 = ssub.s32 %s23, %s30
      %p32 = scmp.eq.s32.totalorder %s31, 0
      %s34 = sadd.s32 %s33, 1
      %s35 = scalar_select %p32, %s33, %s34
      %p38 = pneg %p32
      %p39 = scmp.eq.s32.totalorder %s23, 1
      %p40 = por %p38, %p39
      %p41 = scmp.ne.s32.totalorder %s33, %s36
      %p42 = scmp.eq.s32.totalorder %s23, 0
      %p43 = por %p41, %p42
      %p44 = scmp.ne.s32.totalorder %s33, %s36
      %p45 = scmp.eq.s32.totalorder %s28, 1
      %p46 = por %p44, %p45
      %p47 = scmp.ne.s32.totalorder %s36, %s37
      %p48 = scmp.eq.s32.totalorder %s28, 0
      %p49 = por %p47, %p48
      %p50 = scmp.ne.s32.totalorder %s36, %s37
      %p51 = scmp.eq.s32.totalorder %s29, 1
      %p52 = por %p50, %p51
      %p54 = scmp.ne.s32.totalorder %s37, %s53
      %p55 = scmp.eq.s32.totalorder %s29, 0
      %p56 = por %p54, %p55
      %s57 = ssub.s32 %s23, %s30
      %p58 = scmp.eq.s32.totalorder %s57, 0
      %s60 = sadd.s32 %s59, 1
      %s61 = scalar_select %p58, %s59, %s60
      %p64 = pneg %p58
      %p65 = scmp.eq.s32.totalorder %s23, 1
      %p66 = por %p64, %p65
      %p67 = scmp.ne.s32.totalorder %s59, %s62
      %p68 = scmp.eq.s32.totalorder %s23, 0
      %p69 = por %p67, %p68
      %p70 = scmp.ne.s32.totalorder %s59, %s62
      %p71 = scmp.eq.s32.totalorder %s28, 1
      %p72 = por %p70, %p71
      %p73 = scmp.ne.s32.totalorder %s62, %s63
      %p74 = scmp.eq.s32.totalorder %s28, 0
      %p75 = por %p73, %p74
      %p76 = scmp.ne.s32.totalorder %s62, %s63
      %p77 = scmp.eq.s32.totalorder %s29, 1
      %p78 = por %p76, %p77
      %p80 = scmp.ne.s32.totalorder %s63, %s79
      %p81 = scmp.eq.s32.totalorder %s29, 0
      %p82 = por %p80, %p81
      %s84 = sadd.s32 %s83, 1
      %p87 = scmp.eq.s32.totalorder %s23, 1
      %p88 = scmp.ne.s32.totalorder %s83, %s85
      %p89 = scmp.eq.s32.totalorder %s23, 0
      %p90 = por %p88, %p89
      %p91 = scmp.ne.s32.totalorder %s83, %s85
      %p92 = scmp.eq.s32.totalorder %s28, 1
      %p93 = por %p91, %p92
      %p94 = scmp.ne.s32.totalorder %s85, %s86
      %p95 = scmp.eq.s32.totalorder %s28, 0
      %p96 = por %p94, %p95
      %p97 = scmp.ne.s32.totalorder %s85, %s86
      %p98 = scmp.eq.s32.totalorder %s29, 1
      %p99 = por %p97, %p98
      %p101 = scmp.ne.s32.totalorder %s86, %s100
      %p102 = scmp.eq.s32.totalorder %s29, 0
      %p103 = por %p101, %p102
      %s105 = sadd.s32 %s104, 1
      %p108 = scmp.eq.s32.totalorder %s23, 1
      %p109 = scmp.ne.s32.totalorder %s104, %s106
      %p110 = scmp.eq.s32.totalorder %s23, 0
      %p111 = por %p109, %p110
      %p112 = scmp.ne.s32.totalorder %s104, %s106
      %p113 = scmp.eq.s32.totalorder %s28, 1
      %p114 = por %p112, %p113
      %p115 = scmp.ne.s32.totalorder %s106, %s107
      %p116 = scmp.eq.s32.totalorder %s28, 0
      %p117 = por %p115, %p116
      %p118 = scmp.ne.s32.totalorder %s106, %s107
      %p119 = scmp.eq.s32.totalorder %s29, 1
      %p120 = por %p118, %p119
      %p122 = scmp.ne.s32.totalorder %s107, %s121
      %p123 = scmp.eq.s32.totalorder %s29, 0
      %p124 = por %p122, %p123
      %s126 = sadd.s32 %s125, 1
      %p129 = scmp.eq.s32.totalorder %s23, 1
      %p130 = scmp.ne.s32.totalorder %s125, %s127
      %p131 = scmp.eq.s32.totalorder %s23, 0
      %p132 = por %p130, %p131
      %p133 = scmp.ne.s32.totalorder %s125, %s127
      %p134 = scmp.eq.s32.totalorder %s28, 1
      %p135 = por %p133, %p134
      %p136 = scmp.ne.s32.totalorder %s127, %s128
      %p137 = scmp.eq.s32.totalorder %s28, 0
      %p138 = por %p136, %p137
      %p139 = scmp.ne.s32.totalorder %s127, %s128
      %p140 = scmp.eq.s32.totalorder %s29, 1
      %p141 = por %p139, %p140
      %p143 = scmp.ne.s32.totalorder %s128, %s142
      %p144 = scmp.eq.s32.totalorder %s29, 0
      %p145 = por %p143, %p144
      %s146 = ssub.s32 %s23, %s30
      %p147 = scmp.eq.s32.totalorder %s146, 0
      %s149 = sadd.s32 %s148, 1
      %s150 = scalar_select %p147, %s148, %s149
      %p153 = pneg %p147
      %p154 = scmp.eq.s32.totalorder %s23, 1
      %p155 = por %p153, %p154
      %p156 = scmp.ne.s32.totalorder %s148, %s151
      %p157 = scmp.eq.s32.totalorder %s23, 0
      %p158 = por %p156, %p157
      %p159 = scmp.ne.s32.totalorder %s148, %s151
      %p160 = scmp.eq.s32.totalorder %s28, 1
      %p161 = por %p159, %p160
      %p162 = scmp.ne.s32.totalorder %s151, %s152
      %p163 = scmp.eq.s32.totalorder %s28, 0
      %p164 = por %p162, %p163
      %p165 = scmp.ne.s32.totalorder %s151, %s152
      %p166 = scmp.eq.s32.totalorder %s29, 1
      %p167 = por %p165, %p166
      %p169 = scmp.ne.s32.totalorder %s152, %s168
      %p170 = scmp.eq.s32.totalorder %s29, 0
      %p171 = por %p169, %p170
      %s172 = ssub.s32 %s23, %s30
      %p173 = scmp.eq.s32.totalorder %s172, 0
      %s175 = sadd.s32 %s174, 1
      %s176 = scalar_select %p173, %s174, %s175
      %p179 = pneg %p173
      %p180 = scmp.eq.s32.totalorder %s23, 1
      %p181 = por %p179, %p180
      %p182 = scmp.ne.s32.totalorder %s174, %s177
      %p183 = scmp.eq.s32.totalorder %s23, 0
      %p184 = por %p182, %p183
      %p185 = scmp.ne.s32.totalorder %s174, %s177
      %p186 = scmp.eq.s32.totalorder %s28, 1
      %p187 = por %p185, %p186
      %p188 = scmp.ne.s32.totalorder %s177, %s178
      %p189 = scmp.eq.s32.totalorder %s28, 0
      %p190 = por %p188, %p189
      %p191 = scmp.ne.s32.totalorder %s177, %s178
      %p192 = scmp.eq.s32.totalorder %s29, 1
      %p193 = por %p191, %p192
      %p195 = scmp.ne.s32.totalorder %s178, %s194
      %p196 = scmp.eq.s32.totalorder %s29, 0
      %p197 = por %p195, %p196
      %p198 = scmp.le.s32.totalorder 1, %s23
      %p199 = scmp.lt.s32.totalorder %s23, 3
      %p200 = pnand %p198, %p199
      %p201 = pneg %p200
      // Predicated region
      $region9: #{tpu_custom_call.1} parent=5 // pred_check
        _
      $region10: #{tpu_custom_call.1} parent=5 // pred_check_branch
        %203 = sbr.rel (%p200) target = $region12
      $region11: #{tpu_custom_call.1} parent=5 // pred_region
        %s204 = ssub.s32 %s23, 1
        // Predicated region
        $region13: #{tpu_custom_call.1} parent=11 // pred_check
          %p205 = pneg %p96
        $region14: #{tpu_custom_call.1} parent=11 // pred_check_branch
          %207 = sbr.rel (%p205) target = $region16
        $region15: #{tpu_custom_call.1} parent=11 // pred_region
          %s209 = ssub.s32 2048, 2048
          %210 = vsyncadd [#allocation6], %s209
          %s211 = sshll.u32 [#allocation5], 4
          %s212 = int_to_ptr.vmem [resolvable:$true] %s211
          %217 = dma.hbm_to_vmem [thread:$0]  %s2, 2048, %s212, [#allocation6], 128, 128, 8
        $region16: #{tpu_custom_call.1} parent=11 // pred_fallthru
          _
        // Predicated region
        $region17: #{tpu_custom_call.1} parent=11 // pred_check
          %p218 = pneg %p117
        $region18: #{tpu_custom_call.1} parent=11 // pred_check_branch
          %220 = sbr.rel (%p218) target = $region20
        $region19: #{tpu_custom_call.1} parent=11 // pred_region
          _
        $region20: #{tpu_custom_call.1} parent=11 // pred_fallthru
          _
        // Predicated region
        $region21: #{tpu_custom_call.1} parent=11 // pred_check
          %p221 = pneg %p138
        $region22: #{tpu_custom_call.1} parent=11 // pred_check_branch
          %223 = sbr.rel (%p221) target = $region24
        $region23: #{tpu_custom_call.1} parent=11 // pred_region
          _
        $region24: #{tpu_custom_call.1} parent=11 // pred_fallthru
          _
      $region12: #{tpu_custom_call.1} parent=5 // pred_fallthru
        _
      %p224 = scmp.lt.s32.totalorder %s23, 2
      // Predicated region
      $region25: #{tpu_custom_call.1} parent=5 // pred_check
        %p225 = pneg %p224
      $region26: #{tpu_custom_call.1} parent=5 // pred_check_branch
        %227 = sbr.rel (%p225) target = $region28
      $region27: #{tpu_custom_call.1} parent=5 // pred_region
        // Predicated region
        $region29: #{tpu_custom_call.1} parent=27 // pred_check
          %p228 = pneg %p43
        $region30: #{tpu_custom_call.1} parent=27 // pred_check_branch
          %230 = sbr.rel (%p228) target = $region32
        $region31: #{tpu_custom_call.1} parent=27 // pred_region
          %p231 = scmp.lt.s32.totalorder %s23, 1
          %s232 = scalar_select %p231, %s23, 1
          %s233 = smul.addr %s232, 8
          %s234 = scalar_lea.vmem %s0, %s233
        $region32: #{tpu_custom_call.1} parent=27 // pred_fallthru
          _
        // Predicated region
        $region33: #{tpu_custom_call.1} parent=27 // pred_check
          %p235 = pneg %p69
        $region34: #{tpu_custom_call.1} parent=27 // pred_check_branch
          %237 = sbr.rel (%p235) target = $region36
        $region35: #{tpu_custom_call.1} parent=27 // pred_region
          %s238 = sand.u32 %s59, 1
          %s239 = scalar_lea.sflag [#allocation3], %s238
          %s240 = sand.u32 %s59, 1
          %s241 = smul.addr %s240, 128
          %s242 = scalar_lea.vmem [#allocation2], %s241
          %s243 = smul.u32 8, %s23
          %s245 = ssub.s32 2048, 2048
          %246 = vsyncadd %s239, %s245
          %s247 = smul.addr %s243, 2
          %s248 = smul.addr %s247, 128
          %s249 = scalar_lea.hbm %s1, %s248
          %s250 = sshll.u32 %s242, 4
          %s251 = int_to_ptr.vmem [resolvable:$true] %s250
          %256 = dma.hbm_to_vmem [thread:$0]  %s249, 2048, %s251, %s239, 128, 128, 8
        $region36: #{tpu_custom_call.1} parent=27 // pred_fallthru
          _
      $region28: #{tpu_custom_call.1} parent=5 // pred_fallthru
        _
      %p257 = scmp.le.s32.totalorder 1, %s23
      %p258 = scmp.lt.s32.totalorder %s23, 3
      %p259 = pnand %p257, %p258
      %p260 = pneg %p259
      // Predicated region
      $region37: #{tpu_custom_call.1} parent=5 // pred_check
        _
      $region38: #{tpu_custom_call.1} parent=5 // pred_check_branch
        %262 = sbr.rel (%p259) target = $region40
      $region39: #{tpu_custom_call.1} parent=5 // pred_region
        %s263 = ssub.s32 %s23, 1
        %s264 = sand.u32 %s62, 1
        %s265 = scalar_lea.sflag [#allocation3], %s264
        %s266 = sand.u32 %s62, 1
        %s267 = smul.addr %s266, 128
        %s268 = scalar_lea.vmem [#allocation2], %s267
        // Predicated region
        $region41: #{tpu_custom_call.1} parent=39 // pred_check
          %p269 = pneg %p75
        $region42: #{tpu_custom_call.1} parent=39 // pred_check_branch
          %271 = sbr.rel (%p269) target = $region44
        $region43: #{tpu_custom_call.1} parent=39 // pred_region
          %272 = dma.done %s265, 2048
        $region44: #{tpu_custom_call.1} parent=39 // pred_fallthru
          _
        // Predicated region
        $region45: #{tpu_custom_call.1} parent=39 // pred_check
          %p273 = pneg %p96
        $region46: #{tpu_custom_call.1} parent=39 // pred_check_branch
          %275 = sbr.rel (%p273) target = $region48
        $region47: #{tpu_custom_call.1} parent=39 // pred_region
          %276 = dma.done [#allocation6], 2048
        $region48: #{tpu_custom_call.1} parent=39 // pred_fallthru
          _
        %p277 = scmp.lt.s32.totalorder %s28, 1
        %s278 = scalar_select %p277, %s28, 1
        %s279 = smul.addr %s278, 8
        %s280 = scalar_lea.vmem %s0, %s279
        %p281 = pneg %p49
        %p282 = pneg %p46
        %s283 = sand.u32 %s62, 1
        %s284 = scalar_lea.sflag [#allocation3], %s283
        %s285 = sand.u32 %s62, 1
        %s286 = smul.addr %s285, 128
        %s287 = scalar_lea.vmem [#allocation2], %s286
        %p288 = pneg %p75
        %p289 = pneg %p72
        %p290 = pneg %p96
        %p291 = pneg %p93
        %p292 = pneg %p117
        %p293 = pneg %p114
        %p294 = pneg %p138
        %p295 = pneg %p135
        %p296 = pneg %p164
        %p297 = pneg %p161
        %s298 = sand.u32 %s151, 1
        %s299 = scalar_lea.sflag [#allocation4], %s298
        %s300 = sand.u32 %s151, 1
        %s301 = smul.addr %s300, 8
        %s302 = scalar_lea.vmem [#allocation7], %s301
        %p303 = pneg %p190
        %p304 = pneg %p187
        %s305 = sand.u32 %s177, 1
        %s306 = scalar_lea.sflag [#allocation9], %s305
        %s307 = sand.u32 %s177, 1
        %s308 = smul.addr %s307, 8
        %s309 = scalar_lea.vmem [#allocation8], %s308
        %p310 = scmp.lt.s32.totalorder %s28, 1
        %s311 = scalar_select %p310, %s28, 1
        %s312 = smul.addr %s311, 8
        %s313 = scalar_lea.vmem %s0, %s312
        %s314 = smul.u32 8, %s28
        %v315 = vld [vmem:[%s268] sm:$0xff]
        %v316 = vld [vmem:[%s268 + $0x8] sm:$0xff]
        %v317 = vld [vmem:[%s268 + $0x10] sm:$0xff]
        %v318 = vld [vmem:[%s268 + $0x18] sm:$0xff]
        %v319 = vld [vmem:[%s268 + $0x20] sm:$0xff]
        %v320 = vld [vmem:[%s268 + $0x28] sm:$0xff]
        %v321 = vld [vmem:[%s268 + $0x30] sm:$0xff]
        %v322 = vld [vmem:[%s268 + $0x38] sm:$0xff]
        %v323 = vld [vmem:[%s268 + $0x40] sm:$0xff]
        %v324 = vld [vmem:[%s268 + $0x48] sm:$0xff]
        %v325 = vld [vmem:[%s268 + $0x50] sm:$0xff]
        %v326 = vld [vmem:[%s268 + $0x58] sm:$0xff]
        %v327 = vld [vmem:[%s268 + $0x60] sm:$0xff]
        %v328 = vld [vmem:[%s268 + $0x68] sm:$0xff]
        %v329 = vld [vmem:[%s268 + $0x70] sm:$0xff]
        %v330 = vld [vmem:[%s268 + $0x78] sm:$0xff]
        %v331 = vld [vmem:[#allocation5] sm:$0xff]
        %v332 = vld [vmem:[#allocation5 + $0x8] sm:$0xff]
        %v333 = vld [vmem:[#allocation5 + $0x10] sm:$0xff]
        %v334 = vld [vmem:[#allocation5 + $0x18] sm:$0xff]
        %v335 = vld [vmem:[#allocation5 + $0x20] sm:$0xff]
        %v336 = vld [vmem:[#allocation5 + $0x28] sm:$0xff]
        %v337 = vld [vmem:[#allocation5 + $0x30] sm:$0xff]
        %v338 = vld [vmem:[#allocation5 + $0x38] sm:$0xff]
        %v339 = vld [vmem:[#allocation5 + $0x40] sm:$0xff]
        %v340 = vld [vmem:[#allocation5 + $0x48] sm:$0xff]
        %v341 = vld [vmem:[#allocation5 + $0x50] sm:$0xff]
        %v342 = vld [vmem:[#allocation5 + $0x58] sm:$0xff]
        %v343 = vld [vmem:[#allocation5 + $0x60] sm:$0xff]
        %v344 = vld [vmem:[#allocation5 + $0x68] sm:$0xff]
        %v345 = vld [vmem:[#allocation5 + $0x70] sm:$0xff]
        %v346 = vld [vmem:[#allocation5 + $0x78] sm:$0xff]
        %v347 = vld [vmem:[%s3] sm:$0x1]
        %v349 = vlaneseq
        %v350 = vshrl.u32 %v349, 7
        %v351 = vsub.s32 0, %v350
        %v352 = vrot.slane %v347, %v351
        %354 = vmatprep.subr.mxu0 0.0
        %355 = vmatpush1.msra.mxu0 %v346
        %356 = vmatprep.subr.mxu0 0.0
        %357 = vmatpush1.msra.mxu0 %v345
        %358 = vmatprep.subr.mxu0 0.0
        %359 = vmatpush1.msra.mxu0 %v344
        %360 = vmatprep.subr.mxu0 0.0
        %361 = vmatpush1.msra.mxu0 %v343
        %362 = vmatprep.subr.mxu0 0.0
        %363 = vmatpush1.msra.mxu0 %v342
        %364 = vmatprep.subr.mxu0 0.0
        %365 = vmatpush1.msra.mxu0 %v341
        %366 = vmatprep.subr.mxu0 0.0
        %367 = vmatpush1.msra.mxu0 %v340
        %368 = vmatprep.subr.mxu0 0.0
        %369 = vmatpush1.msra.mxu0 %v339
        %370 = vmatprep.subr.mxu0 0.0
        %371 = vmatpush1.msra.mxu0 %v338
        %372 = vmatprep.subr.mxu0 0.0
        %373 = vmatpush1.msra.mxu0 %v337
        %374 = vmatprep.subr.mxu0 0.0
        %375 = vmatpush1.msra.mxu0 %v336
        %376 = vmatprep.subr.mxu0 0.0
        %377 = vmatpush1.msra.mxu0 %v335
        %378 = vmatprep.subr.mxu0 0.0
        %379 = vmatpush1.msra.mxu0 %v334
        %380 = vmatprep.subr.mxu0 0.0
        %381 = vmatpush1.msra.mxu0 %v333
        %382 = vmatprep.subr.mxu0 0.0
        %383 = vmatpush1.msra.mxu0 %v332
        %384 = vmatprep.subr.mxu0 0.0
        %385 = vmatpush1.msra.mxu0 %v331
        %386 = vmatprep.subr.mxu0 0.0
        %387 = vmatpush2.msra.mxu0 0.0
        %388 = vmatprep.subr.mxu0 0.0
        %389 = vmatpush2.msra.mxu0 0.0
        %390 = vmatprep.subr.mxu0 0.0
        %391 = vmatpush2.msra.mxu0 0.0
        %392 = vmatprep.subr.mxu0 0.0
        %393 = vmatpush2.msra.mxu0 0.0
        %394 = vmatprep.subr.mxu0 0.0
        %395 = vmatpush2.msra.mxu0 0.0
        %396 = vmatprep.subr.mxu0 0.0
        %397 = vmatpush2.msra.mxu0 0.0
        %398 = vmatprep.subr.mxu0 0.0
        %399 = vmatpush2.msra.mxu0 0.0
        %400 = vmatprep.subr.mxu0 0.0
        %401 = vmatpush2.msra.mxu0 0.0
        %402 = vmatprep.subr.mxu0 0.0
        %403 = vmatpush2.msra.mxu0 0.0
        %404 = vmatprep.subr.mxu0 0.0
        %405 = vmatpush2.msra.mxu0 0.0
        %406 = vmatprep.subr.mxu0 0.0
        %407 = vmatpush2.msra.mxu0 0.0
        %408 = vmatprep.subr.mxu0 0.0
        %409 = vmatpush2.msra.mxu0 0.0
        %410 = vmatprep.subr.mxu0 0.0
        %411 = vmatpush2.msra.mxu0 0.0
        %412 = vmatprep.subr.mxu0 0.0
        %413 = vmatpush2.msra.mxu0 0.0
        %414 = vmatprep.subr.mxu0 0.0
        %415 = vmatpush2.msra.mxu0 0.0
        %416 = vmatprep.subr.mxu0 0.0
        %417 = vmatpush2.msra.mxu0 0.0
        %418 = vmatprep.mubr.f32.mxu0 0.0
        %419 = vmatmul.mubr.f32.gmra.mxu0 %v315
        %v420 = vpop.f32.mrf.mxu0
        %v421 = vadd.f32 %v352, %v420
        %v422 = vpop.f32.mrf.mxu0
        %423 = vmatprep.mubr.f32.mxu0 0.0
        %424 = vmatmul.mubr.f32.gmra.mxu0 %v316
        %v425 = vpop.f32.mrf.mxu0
        %v426 = vadd.f32 %v352, %v425
        %v427 = vpop.f32.mrf.mxu0
        %428 = vmatprep.mubr.f32.mxu0 0.0
        %429 = vmatmul.mubr.f32.gmra.mxu0 %v317
        %v430 = vpop.f32.mrf.mxu0
        %v431 = vadd.f32 %v352, %v430
        %v432 = vpop.f32.mrf.mxu0
        %433 = vmatprep.mubr.f32.mxu0 0.0
        %434 = vmatmul.mubr.f32.gmra.mxu0 %v318
        %v435 = vpop.f32.mrf.mxu0
        %v436 = vadd.f32 %v352, %v435
        %v437 = vpop.f32.mrf.mxu0
        %438 = vmatprep.mubr.f32.mxu0 0.0
        %439 = vmatmul.mubr.f32.gmra.mxu0 %v319
        %v440 = vpop.f32.mrf.mxu0
        %v441 = vadd.f32 %v352, %v440
        %v442 = vpop.f32.mrf.mxu0
        %443 = vmatprep.mubr.f32.mxu0 0.0
        %444 = vmatmul.mubr.f32.gmra.mxu0 %v320
        %v445 = vpop.f32.mrf.mxu0
        %v446 = vadd.f32 %v352, %v445
        %v447 = vpop.f32.mrf.mxu0
        %448 = vmatprep.mubr.f32.mxu0 0.0
        %449 = vmatmul.mubr.f32.gmra.mxu0 %v321
        %v450 = vpop.f32.mrf.mxu0
        %v451 = vadd.f32 %v352, %v450
        %v452 = vpop.f32.mrf.mxu0
        %453 = vmatprep.mubr.f32.mxu0 0.0
        %454 = vmatmul.mubr.f32.gmra.mxu0 %v322
        %v455 = vpop.f32.mrf.mxu0
        %v456 = vadd.f32 %v352, %v455
        %v457 = vpop.f32.mrf.mxu0
        %458 = vmatprep.mubr.f32.mxu0 0.0
        %459 = vmatmul.mubr.f32.gmra.mxu0 %v323
        %v460 = vpop.f32.mrf.mxu0
        %v461 = vadd.f32 %v352, %v460
        %v462 = vpop.f32.mrf.mxu0
        %463 = vmatprep.mubr.f32.mxu0 0.0
        %464 = vmatmul.mubr.f32.gmra.mxu0 %v324
        %v465 = vpop.f32.mrf.mxu0
        %v466 = vadd.f32 %v352, %v465
        %v467 = vpop.f32.mrf.mxu0
        %468 = vmatprep.mubr.f32.mxu0 0.0
        %469 = vmatmul.mubr.f32.gmra.mxu0 %v325
        %v470 = vpop.f32.mrf.mxu0
        %v471 = vadd.f32 %v352, %v470
        %v472 = vpop.f32.mrf.mxu0
        %473 = vmatprep.mubr.f32.mxu0 0.0
        %474 = vmatmul.mubr.f32.gmra.mxu0 %v326
        %v475 = vpop.f32.mrf.mxu0
        %v476 = vadd.f32 %v352, %v475
        %v477 = vpop.f32.mrf.mxu0
        %478 = vmatprep.mubr.f32.mxu0 0.0
        %479 = vmatmul.mubr.f32.gmra.mxu0 %v327
        %v480 = vpop.f32.mrf.mxu0
        %v481 = vadd.f32 %v352, %v480
        %v482 = vpop.f32.mrf.mxu0
        %483 = vmatprep.mubr.f32.mxu0 0.0
        %484 = vmatmul.mubr.f32.gmra.mxu0 %v328
        %v485 = vpop.f32.mrf.mxu0
        %v486 = vadd.f32 %v352, %v485
        %v487 = vpop.f32.mrf.mxu0
        %488 = vmatprep.mubr.f32.mxu0 0.0
        %489 = vmatmul.mubr.f32.gmra.mxu0 %v329
        %v490 = vpop.f32.mrf.mxu0
        %v491 = vadd.f32 %v352, %v490
        %v492 = vpop.f32.mrf.mxu0
        %493 = vmatprep.mubr.f32.mxu0 0.0
        %494 = vmatmul.mubr.f32.gmra.mxu0 %v330
        %v495 = vpop.f32.mrf.mxu0
        %v496 = vadd.f32 %v352, %v495
        %v497 = vpop.f32.mrf.mxu0
        %498 = vdwg.mxu0
        %v499 = vtanh.pop %v421
        %v500 = vtanh.pop %v426
        %v501 = vtanh.pop %v431
        %v502 = vtanh.pop %v436
        %v503 = vtanh.pop %v441
        %v504 = vtanh.pop %v446
        %v505 = vtanh.pop %v451
        %v506 = vtanh.pop %v456
        %v507 = vtanh.pop %v461
        %v508 = vtanh.pop %v466
        %v509 = vtanh.pop %v471
        %v510 = vtanh.pop %v476
        %v511 = vtanh.pop %v481
        %v512 = vtanh.pop %v486
        %v513 = vtanh.pop %v491
        %v514 = vtanh.pop %v496
        %v515 = vld [vmem:[%s4] sm:$0x1]
        %v517 = vlaneseq
        %v518 = vshrl.u32 %v517, 7
        %v519 = vsub.s32 0, %v518
        %v520 = vrot.slane %v515, %v519
        %v522 = vmul.f32 %v499, %v520
        %v523 = vmul.f32 %v500, %v520
        %v524 = vmul.f32 %v501, %v520
        %v525 = vmul.f32 %v502, %v520
        %v526 = vmul.f32 %v503, %v520
        %v527 = vmul.f32 %v504, %v520
        %v528 = vmul.f32 %v505, %v520
        %v529 = vmul.f32 %v506, %v520
        %v530 = vmul.f32 %v507, %v520
        %v531 = vmul.f32 %v508, %v520
        %v532 = vmul.f32 %v509, %v520
        %v533 = vmul.f32 %v510, %v520
        %v534 = vmul.f32 %v511, %v520
        %v535 = vmul.f32 %v512, %v520
        %v536 = vmul.f32 %v513, %v520
        %v537 = vmul.f32 %v514, %v520
        %538 = vadd.xlane.f32.xlu0 %v522
        %v539 = vpop.xlane.xlu0 %538
        %540 = vadd.xlane.f32.xlu0 %v523
        %v541 = vpop.xlane.xlu0 %540
        %542 = vadd.xlane.f32.xlu0 %v524
        %v543 = vpop.xlane.xlu0 %542
        %544 = vadd.xlane.f32.xlu0 %v525
        %v545 = vpop.xlane.xlu0 %544
        %546 = vadd.xlane.f32.xlu0 %v526
        %v547 = vpop.xlane.xlu0 %546
        %548 = vadd.xlane.f32.xlu0 %v527
        %v549 = vpop.xlane.xlu0 %548
        %550 = vadd.xlane.f32.xlu0 %v528
        %v551 = vpop.xlane.xlu0 %550
        %552 = vadd.xlane.f32.xlu0 %v529
        %v553 = vpop.xlane.xlu0 %552
        %554 = vadd.xlane.f32.xlu0 %v530
        %v555 = vpop.xlane.xlu0 %554
        %556 = vadd.xlane.f32.xlu0 %v531
        %v557 = vpop.xlane.xlu0 %556
        %558 = vadd.xlane.f32.xlu0 %v532
        %v559 = vpop.xlane.xlu0 %558
        %560 = vadd.xlane.f32.xlu0 %v533
        %v561 = vpop.xlane.xlu0 %560
        %562 = vadd.xlane.f32.xlu0 %v534
        %v563 = vpop.xlane.xlu0 %562
        %564 = vadd.xlane.f32.xlu0 %v535
        %v565 = vpop.xlane.xlu0 %564
        %566 = vadd.xlane.f32.xlu0 %v536
        %v567 = vpop.xlane.xlu0 %566
        %568 = vadd.xlane.f32.xlu0 %v537
        %v569 = vpop.xlane.xlu0 %568
        %v570 = vld [vmem:[%s313] sm:$0xff]
        %v571 = vlaneseq
        %v572 = vand.u32 %v571, 127
        %573 = vset.pattern.permute.xlu0 0
        %574 = vperm.xlu0 %573, %v570
        %v575 = vpop.permute.xlu0 %574
        %vm576 = vcmp.lt.s32.totalorder %v572, %v575
        %v593 = vlaneseq
        %v594 = vshrl.u32 %v593, 7
        %v595 = vsub.s32 %v572, %v594
        %v596 = vrot.slane %v539, %v595
        %v597 = vadd.s32 %v572, 4294967288
        %v598 = vlaneseq
        %v599 = vshrl.u32 %v598, 7
        %v600 = vsub.s32 %v597, %v599
        %v601 = vrot.slane %v541, %v600
        %vm602 = vcmask 130112
        %v603 = vsel %vm602, %v601, %v596
        %v604 = vlaneseq
        %v605 = vshrl.u32 %v604, 7
        %v606 = vsub.s32 %v572, %v605
        %v607 = vrot.slane %v543, %v606
        %v608 = vlaneseq
        %v609 = vshrl.u32 %v608, 7
        %v610 = vsub.s32 %v597, %v609
        %v611 = vrot.slane %v545, %v610
        %v612 = vsel %vm602, %v611, %v607
        %v613 = vlaneseq
        %v614 = vshrl.u32 %v613, 7
        %v615 = vsub.s32 %v572, %v614
        %v616 = vrot.slane %v547, %v615
        %v617 = vlaneseq
        %v618 = vshrl.u32 %v617, 7
        %v619 = vsub.s32 %v597, %v618
        %v620 = vrot.slane %v549, %v619
        %v621 = vsel %vm602, %v620, %v616
        %v622 = vlaneseq
        %v623 = vshrl.u32 %v622, 7
        %v624 = vsub.s32 %v572, %v623
        %v625 = vrot.slane %v551, %v624
        %v626 = vlaneseq
        %v627 = vshrl.u32 %v626, 7
        %v628 = vsub.s32 %v597, %v627
        %v629 = vrot.slane %v553, %v628
        %v630 = vsel %vm602, %v629, %v625
        %v631 = vlaneseq
        %v632 = vshrl.u32 %v631, 7
        %v633 = vsub.s32 %v572, %v632
        %v634 = vrot.slane %v555, %v633
        %v635 = vlaneseq
        %v636 = vshrl.u32 %v635, 7
        %v637 = vsub.s32 %v597, %v636
        %v638 = vrot.slane %v557, %v637
        %v639 = vsel %vm602, %v638, %v634
        %v640 = vlaneseq
        %v641 = vshrl.u32 %v640, 7
        %v642 = vsub.s32 %v572, %v641
        %v643 = vrot.slane %v559, %v642
        %v644 = vlaneseq
        %v645 = vshrl.u32 %v644, 7
        %v646 = vsub.s32 %v597, %v645
        %v647 = vrot.slane %v561, %v646
        %v648 = vsel %vm602, %v647, %v643
        %v649 = vlaneseq
        %v650 = vshrl.u32 %v649, 7
        %v651 = vsub.s32 %v572, %v650
        %v652 = vrot.slane %v563, %v651
        %v653 = vlaneseq
        %v654 = vshrl.u32 %v653, 7
        %v655 = vsub.s32 %v597, %v654
        %v656 = vrot.slane %v565, %v655
        %v657 = vsel %vm602, %v656, %v652
        %v658 = vlaneseq
        %v659 = vshrl.u32 %v658, 7
        %v660 = vsub.s32 %v572, %v659
        %v661 = vrot.slane %v567, %v660
        %v662 = vlaneseq
        %v663 = vshrl.u32 %v662, 7
        %v664 = vsub.s32 %v597, %v663
        %v665 = vrot.slane %v569, %v664
        %v666 = vsel %vm602, %v665, %v661
        %vm667 = vcmask 1041409
        %v668 = vsel %vm667, %v612, %v603
        %vm669 = vcmask 1042434
        %v670 = vsel %vm669, %v621, %v668
        %vm671 = vcmask 1043459
        %v672 = vsel %vm671, %v630, %v670
        %vm673 = vcmask 1044484
        %v674 = vsel %vm673, %v639, %v672
        %vm675 = vcmask 1045509
        %v676 = vsel %vm675, %v648, %v674
        %vm677 = vcmask 1046534
        %v678 = vsel %vm677, %v657, %v676
        %vm679 = vcmask 1047559
        %v680 = vsel %vm679, %v666, %v678
        %v682 = vsel %vm576, %v680, -1e+30
        %vm683 = vcmask 130048
        %v684 = vsel %vm683, %v682, -inf
        %685 = vmax.xlane.f32.xlu0 %v684
        %v686 = vpop.xlane.xlu0 %685
        %v687 = vsub.f32 %v682, %v686
        %v688 = vmul.f32 %v687, 1.442695
        %v689 = vpow.pop %v688
        %v690 = vsel %vm576, %v689, 0.0
        %v691 = vsel %vm683, %v690, 0.0
        %692 = vadd.xlane.f32.xlu0 %v691
        %v693 = vpop.xlane.xlu0 %692
        %v694 = vrcp.pop %v693
        %v695 = vmul.f32 %v690, %v694
        %696 = vst.msk [vmem:[%s309] sm:$0xff] %vm683, %v695
        %v698 = vcombine.high %v695, %v695
        %v700 = vunpack.c.l.s4 1966171168
        %v701 = vunpack.c.0.s8 %v700
        %v702 = vlaneseq
        %v703 = vshrl.u32 %v702, 7
        %v704 = vsub.s32 %v701, %v703
        %v705 = vrot.slane %v695, %v704
        %v707 = vunpack.c.l.s4 1966171168
        %v708 = vunpack.c.0.s8 %v707
        %v709 = vlaneseq
        %v710 = vshrl.u32 %v709, 7
        %v711 = vsub.s32 %v708, %v710
        %v712 = vrot.slane %v698, %v711
        %v713 = vcombine.high %v705, %v705
        %v714 = vcombine.high %v712, %v712
        %v716 = vunpack.c.l.s4 1966171168
        %v717 = vunpack.c.0.s8 %v716
        %v718 = vlaneseq
        %v719 = vshrl.u32 %v718, 7
        %v720 = vsub.s32 %v717, %v719
        %v721 = vrot.slane %v705, %v720
        %v723 = vunpack.c.l.s4 1966171168
        %v724 = vunpack.c.0.s8 %v723
        %v725 = vlaneseq
        %v726 = vshrl.u32 %v725, 7
        %v727 = vsub.s32 %v724, %v726
        %v728 = vrot.slane %v712, %v727
        %v730 = vunpack.c.l.s4 1966171168
        %v731 = vunpack.c.0.s8 %v730
        %v732 = vlaneseq
        %v733 = vshrl.u32 %v732, 7
        %v734 = vsub.s32 %v731, %v733
        %v735 = vrot.slane %v713, %v734
        %v737 = vunpack.c.l.s4 1966171168
        %v738 = vunpack.c.0.s8 %v737
        %v739 = vlaneseq
        %v740 = vshrl.u32 %v739, 7
        %v741 = vsub.s32 %v738, %v740
        %v742 = vrot.slane %v714, %v741
        %v743 = vcombine.high %v721, %v721
        %v744 = vcombine.high %v728, %v728
        %v745 = vcombine.high %v735, %v735
        %v746 = vcombine.high %v742, %v742
        %v747 = vsel %vm683, %v721, 0
        %749 = vmatprep.subr.mxu0 0.0
        %750 = vmatpush1.msra.mxu0 0.0
        %751 = vmatprep.subr.mxu0 0.0
        %752 = vmatpush1.msra.mxu0 0.0
        %753 = vmatprep.subr.mxu0 0.0
        %754 = vmatpush1.msra.mxu0 0.0
        %755 = vmatprep.subr.mxu0 0.0
        %756 = vmatpush1.msra.mxu0 0.0
        %757 = vmatprep.subr.mxu0 0.0
        %758 = vmatpush1.msra.mxu0 0.0
        %759 = vmatprep.subr.mxu0 0.0
        %760 = vmatpush1.msra.mxu0 0.0
        %761 = vmatprep.subr.mxu0 0.0
        %762 = vmatpush1.msra.mxu0 0.0
        %763 = vmatprep.subr.mxu0 0.0
        %764 = vmatpush1.msra.mxu0 0.0
        %765 = vmatprep.subr.mxu0 0.0
        %766 = vmatpush1.msra.mxu0 0.0
        %767 = vmatprep.subr.mxu0 0.0
        %768 = vmatpush1.msra.mxu0 0.0
        %769 = vmatprep.subr.mxu0 0.0
        %770 = vmatpush1.msra.mxu0 0.0
        %771 = vmatprep.subr.mxu0 0.0
        %772 = vmatpush1.msra.mxu0 0.0
        %773 = vmatprep.subr.mxu0 0.0
        %774 = vmatpush1.msra.mxu0 0.0
        %775 = vmatprep.subr.mxu0 0.0
        %776 = vmatpush1.msra.mxu0 0.0
        %777 = vmatprep.subr.mxu0 0.0
        %778 = vmatpush1.msra.mxu0 %v316
        %779 = vmatprep.subr.mxu0 0.0
        %780 = vmatpush1.msra.mxu0 %v315
        %781 = vmatprep.subr.mxu0 0.0
        %782 = vmatpush2.msra.mxu0 0.0
        %783 = vmatprep.subr.mxu0 0.0
        %784 = vmatpush2.msra.mxu0 0.0
        %785 = vmatprep.subr.mxu0 0.0
        %786 = vmatpush2.msra.mxu0 0.0
        %787 = vmatprep.subr.mxu0 0.0
        %788 = vmatpush2.msra.mxu0 0.0
        %789 = vmatprep.subr.mxu0 0.0
        %790 = vmatpush2.msra.mxu0 0.0
        %791 = vmatprep.subr.mxu0 0.0
        %792 = vmatpush2.msra.mxu0 0.0
        %793 = vmatprep.subr.mxu0 0.0
        %794 = vmatpush2.msra.mxu0 0.0
        %795 = vmatprep.subr.mxu0 0.0
        %796 = vmatpush2.msra.mxu0 0.0
        %797 = vmatprep.subr.mxu0 0.0
        %798 = vmatpush2.msra.mxu0 0.0
        %799 = vmatprep.subr.mxu0 0.0
        %800 = vmatpush2.msra.mxu0 0.0
        %801 = vmatprep.subr.mxu0 0.0
        %802 = vmatpush2.msra.mxu0 0.0
        %803 = vmatprep.subr.mxu0 0.0
        %804 = vmatpush2.msra.mxu0 0.0
        %805 = vmatprep.subr.mxu0 0.0
        %806 = vmatpush2.msra.mxu0 0.0
        %807 = vmatprep.subr.mxu0 0.0
        %808 = vmatpush2.msra.mxu0 0.0
        %809 = vmatprep.subr.mxu0 0.0
        %810 = vmatpush2.msra.mxu0 0.0
        %811 = vmatprep.subr.mxu0 0.0
        %812 = vmatpush2.msra.mxu0 0.0
        %813 = vmatprep.mubr.f32.mxu0 0.0
        %814 = vmatmul.mubr.f32.gmra.mxu0 %v747
        %v815 = vpop.f32.mrf.mxu0
        %v816 = vadd.f32 0.0, %v815
        %v817 = vpop.f32.mrf.mxu0
        %818 = vdwg.mxu0
        %v819 = vsel %vm683, %v735, 0
        %821 = vmatprep.subr.mxu0 0.0
        %822 = vmatpush1.msra.mxu0 0.0
        %823 = vmatprep.subr.mxu0 0.0
        %824 = vmatpush1.msra.mxu0 0.0
        %825 = vmatprep.subr.mxu0 0.0
        %826 = vmatpush1.msra.mxu0 0.0
        %827 = vmatprep.subr.mxu0 0.0
        %828 = vmatpush1.msra.mxu0 0.0
        %829 = vmatprep.subr.mxu0 0.0
        %830 = vmatpush1.msra.mxu0 0.0
        %831 = vmatprep.subr.mxu0 0.0
        %832 = vmatpush1.msra.mxu0 0.0
        %833 = vmatprep.subr.mxu0 0.0
        %834 = vmatpush1.msra.mxu0 0.0
        %835 = vmatprep.subr.mxu0 0.0
        %836 = vmatpush1.msra.mxu0 0.0
        %837 = vmatprep.subr.mxu0 0.0
        %838 = vmatpush1.msra.mxu0 0.0
        %839 = vmatprep.subr.mxu0 0.0
        %840 = vmatpush1.msra.mxu0 0.0
        %841 = vmatprep.subr.mxu0 0.0
        %842 = vmatpush1.msra.mxu0 0.0
        %843 = vmatprep.subr.mxu0 0.0
        %844 = vmatpush1.msra.mxu0 0.0
        %845 = vmatprep.subr.mxu0 0.0
        %846 = vmatpush1.msra.mxu0 0.0
        %847 = vmatprep.subr.mxu0 0.0
        %848 = vmatpush1.msra.mxu0 0.0
        %849 = vmatprep.subr.mxu0 0.0
        %850 = vmatpush1.msra.mxu0 %v318
        %851 = vmatprep.subr.mxu0 0.0
        %852 = vmatpush1.msra.mxu0 %v317
        %853 = vmatprep.subr.mxu0 0.0
        %854 = vmatpush2.msra.mxu0 0.0
        %855 = vmatprep.subr.mxu0 0.0
        %856 = vmatpush2.msra.mxu0 0.0
        %857 = vmatprep.subr.mxu0 0.0
        %858 = vmatpush2.msra.mxu0 0.0
        %859 = vmatprep.subr.mxu0 0.0
        %860 = vmatpush2.msra.mxu0 0.0
        %861 = vmatprep.subr.mxu0 0.0
        %862 = vmatpush2.msra.mxu0 0.0
        %863 = vmatprep.subr.mxu0 0.0
        %864 = vmatpush2.msra.mxu0 0.0
        %865 = vmatprep.subr.mxu0 0.0
        %866 = vmatpush2.msra.mxu0 0.0
        %867 = vmatprep.subr.mxu0 0.0
        %868 = vmatpush2.msra.mxu0 0.0
        %869 = vmatprep.subr.mxu0 0.0
        %870 = vmatpush2.msra.mxu0 0.0
        %871 = vmatprep.subr.mxu0 0.0
        %872 = vmatpush2.msra.mxu0 0.0
        %873 = vmatprep.subr.mxu0 0.0
        %874 = vmatpush2.msra.mxu0 0.0
        %875 = vmatprep.subr.mxu0 0.0
        %876 = vmatpush2.msra.mxu0 0.0
        %877 = vmatprep.subr.mxu0 0.0
        %878 = vmatpush2.msra.mxu0 0.0
        %879 = vmatprep.subr.mxu0 0.0
        %880 = vmatpush2.msra.mxu0 0.0
        %881 = vmatprep.subr.mxu0 0.0
        %882 = vmatpush2.msra.mxu0 0.0
        %883 = vmatprep.subr.mxu0 0.0
        %884 = vmatpush2.msra.mxu0 0.0
        %885 = vmatprep.mubr.f32.mxu0 0.0
        %886 = vmatmul.mubr.f32.gmra.mxu0 %v819
        %v887 = vpop.f32.mrf.mxu0
        %v888 = vadd.f32 0.0, %v887
        %v889 = vpop.f32.mrf.mxu0
        %890 = vdwg.mxu0
        %v891 = vsel %vm683, %v743, 0
        %893 = vmatprep.subr.mxu0 0.0
        %894 = vmatpush1.msra.mxu0 0.0
        %895 = vmatprep.subr.mxu0 0.0
        %896 = vmatpush1.msra.mxu0 0.0
        %897 = vmatprep.subr.mxu0 0.0
        %898 = vmatpush1.msra.mxu0 0.0
        %899 = vmatprep.subr.mxu0 0.0
        %900 = vmatpush1.msra.mxu0 0.0
        %901 = vmatprep.subr.mxu0 0.0
        %902 = vmatpush1.msra.mxu0 0.0
        %903 = vmatprep.subr.mxu0 0.0
        %904 = vmatpush1.msra.mxu0 0.0
        %905 = vmatprep.subr.mxu0 0.0
        %906 = vmatpush1.msra.mxu0 0.0
        %907 = vmatprep.subr.mxu0 0.0
        %908 = vmatpush1.msra.mxu0 0.0
        %909 = vmatprep.subr.mxu0 0.0
        %910 = vmatpush1.msra.mxu0 0.0
        %911 = vmatprep.subr.mxu0 0.0
        %912 = vmatpush1.msra.mxu0 0.0
        %913 = vmatprep.subr.mxu0 0.0
        %914 = vmatpush1.msra.mxu0 0.0
        %915 = vmatprep.subr.mxu0 0.0
        %916 = vmatpush1.msra.mxu0 0.0
        %917 = vmatprep.subr.mxu0 0.0
        %918 = vmatpush1.msra.mxu0 0.0
        %919 = vmatprep.subr.mxu0 0.0
        %920 = vmatpush1.msra.mxu0 0.0
        %921 = vmatprep.subr.mxu0 0.0
        %922 = vmatpush1.msra.mxu0 %v320
        %923 = vmatprep.subr.mxu0 0.0
        %924 = vmatpush1.msra.mxu0 %v319
        %925 = vmatprep.subr.mxu0 0.0
        %926 = vmatpush2.msra.mxu0 0.0
        %927 = vmatprep.subr.mxu0 0.0
        %928 = vmatpush2.msra.mxu0 0.0
        %929 = vmatprep.subr.mxu0 0.0
        %930 = vmatpush2.msra.mxu0 0.0
        %931 = vmatprep.subr.mxu0 0.0
        %932 = vmatpush2.msra.mxu0 0.0
        %933 = vmatprep.subr.mxu0 0.0
        %934 = vmatpush2.msra.mxu0 0.0
        %935 = vmatprep.subr.mxu0 0.0
        %936 = vmatpush2.msra.mxu0 0.0
        %937 = vmatprep.subr.mxu0 0.0
        %938 = vmatpush2.msra.mxu0 0.0
        %939 = vmatprep.subr.mxu0 0.0
        %940 = vmatpush2.msra.mxu0 0.0
        %941 = vmatprep.subr.mxu0 0.0
        %942 = vmatpush2.msra.mxu0 0.0
        %943 = vmatprep.subr.mxu0 0.0
        %944 = vmatpush2.msra.mxu0 0.0
        %945 = vmatprep.subr.mxu0 0.0
        %946 = vmatpush2.msra.mxu0 0.0
        %947 = vmatprep.subr.mxu0 0.0
        %948 = vmatpush2.msra.mxu0 0.0
        %949 = vmatprep.subr.mxu0 0.0
        %950 = vmatpush2.msra.mxu0 0.0
        %951 = vmatprep.subr.mxu0 0.0
        %952 = vmatpush2.msra.mxu0 0.0
        %953 = vmatprep.subr.mxu0 0.0
        %954 = vmatpush2.msra.mxu0 0.0
        %955 = vmatprep.subr.mxu0 0.0
        %956 = vmatpush2.msra.mxu0 0.0
        %957 = vmatprep.mubr.f32.mxu0 0.0
        %958 = vmatmul.mubr.f32.gmra.mxu0 %v891
        %v959 = vpop.f32.mrf.mxu0
        %v960 = vadd.f32 0.0, %v959
        %v961 = vpop.f32.mrf.mxu0
        %962 = vdwg.mxu0
        %v963 = vsel %vm683, %v745, 0
        %965 = vmatprep.subr.mxu0 0.0
        %966 = vmatpush1.msra.mxu0 0.0
        %967 = vmatprep.subr.mxu0 0.0
        %968 = vmatpush1.msra.mxu0 0.0
        %969 = vmatprep.subr.mxu0 0.0
        %970 = vmatpush1.msra.mxu0 0.0
        %971 = vmatprep.subr.mxu0 0.0
        %972 = vmatpush1.msra.mxu0 0.0
        %973 = vmatprep.subr.mxu0 0.0
        %974 = vmatpush1.msra.mxu0 0.0
        %975 = vmatprep.subr.mxu0 0.0
        %976 = vmatpush1.msra.mxu0 0.0
        %977 = vmatprep.subr.mxu0 0.0
        %978 = vmatpush1.msra.mxu0 0.0
        %979 = vmatprep.subr.mxu0 0.0
        %980 = vmatpush1.msra.mxu0 0.0
        %981 = vmatprep.subr.mxu0 0.0
        %982 = vmatpush1.msra.mxu0 0.0
        %983 = vmatprep.subr.mxu0 0.0
        %984 = vmatpush1.msra.mxu0 0.0
        %985 = vmatprep.subr.mxu0 0.0
        %986 = vmatpush1.msra.mxu0 0.0
        %987 = vmatprep.subr.mxu0 0.0
        %988 = vmatpush1.msra.mxu0 0.0
        %989 = vmatprep.subr.mxu0 0.0
        %990 = vmatpush1.msra.mxu0 0.0
        %991 = vmatprep.subr.mxu0 0.0
        %992 = vmatpush1.msra.mxu0 0.0
        %993 = vmatprep.subr.mxu0 0.0
        %994 = vmatpush1.msra.mxu0 %v322
        %995 = vmatprep.subr.mxu0 0.0
        %996 = vmatpush1.msra.mxu0 %v321
        %997 = vmatprep.subr.mxu0 0.0
        %998 = vmatpush2.msra.mxu0 0.0
        %999 = vmatprep.subr.mxu0 0.0
        %1000 = vmatpush2.msra.mxu0 0.0
        %1001 = vmatprep.subr.mxu0 0.0
        %1002 = vmatpush2.msra.mxu0 0.0
        %1003 = vmatprep.subr.mxu0 0.0
        %1004 = vmatpush2.msra.mxu0 0.0
        %1005 = vmatprep.subr.mxu0 0.0
        %1006 = vmatpush2.msra.mxu0 0.0
        %1007 = vmatprep.subr.mxu0 0.0
        %1008 = vmatpush2.msra.mxu0 0.0
        %1009 = vmatprep.subr.mxu0 0.0
        %1010 = vmatpush2.msra.mxu0 0.0
        %1011 = vmatprep.subr.mxu0 0.0
        %1012 = vmatpush2.msra.mxu0 0.0
        %1013 = vmatprep.subr.mxu0 0.0
        %1014 = vmatpush2.msra.mxu0 0.0
        %1015 = vmatprep.subr.mxu0 0.0
        %1016 = vmatpush2.msra.mxu0 0.0
        %1017 = vmatprep.subr.mxu0 0.0
        %1018 = vmatpush2.msra.mxu0 0.0
        %1019 = vmatprep.subr.mxu0 0.0
        %1020 = vmatpush2.msra.mxu0 0.0
        %1021 = vmatprep.subr.mxu0 0.0
        %1022 = vmatpush2.msra.mxu0 0.0
        %1023 = vmatprep.subr.mxu0 0.0
        %1024 = vmatpush2.msra.mxu0 0.0
        %1025 = vmatprep.subr.mxu0 0.0
        %1026 = vmatpush2.msra.mxu0 0.0
        %1027 = vmatprep.subr.mxu0 0.0
        %1028 = vmatpush2.msra.mxu0 0.0
        %1029 = vmatprep.mubr.f32.mxu0 0.0
        %1030 = vmatmul.mubr.f32.gmra.mxu0 %v963
        %v1031 = vpop.f32.mrf.mxu0
        %v1032 = vadd.f32 0.0, %v1031
        %v1033 = vpop.f32.mrf.mxu0
        %1034 = vdwg.mxu0
        %v1035 = vsel %vm683, %v728, 0
        %1037 = vmatprep.subr.mxu0 0.0
        %1038 = vmatpush1.msra.mxu0 0.0
        %1039 = vmatprep.subr.mxu0 0.0
        %1040 = vmatpush1.msra.mxu0 0.0
        %1041 = vmatprep.subr.mxu0 0.0
        %1042 = vmatpush1.msra.mxu0 0.0
        %1043 = vmatprep.subr.mxu0 0.0
        %1044 = vmatpush1.msra.mxu0 0.0
        %1045 = vmatprep.subr.mxu0 0.0
        %1046 = vmatpush1.msra.mxu0 0.0
        %1047 = vmatprep.subr.mxu0 0.0
        %1048 = vmatpush1.msra.mxu0 0.0
        %1049 = vmatprep.subr.mxu0 0.0
        %1050 = vmatpush1.msra.mxu0 0.0
        %1051 = vmatprep.subr.mxu0 0.0
        %1052 = vmatpush1.msra.mxu0 0.0
        %1053 = vmatprep.subr.mxu0 0.0
        %1054 = vmatpush1.msra.mxu0 0.0
        %1055 = vmatprep.subr.mxu0 0.0
        %1056 = vmatpush1.msra.mxu0 0.0
        %1057 = vmatprep.subr.mxu0 0.0
        %1058 = vmatpush1.msra.mxu0 0.0
        %1059 = vmatprep.subr.mxu0 0.0
        %1060 = vmatpush1.msra.mxu0 0.0
        %1061 = vmatprep.subr.mxu0 0.0
        %1062 = vmatpush1.msra.mxu0 0.0
        %1063 = vmatprep.subr.mxu0 0.0
        %1064 = vmatpush1.msra.mxu0 0.0
        %1065 = vmatprep.subr.mxu0 0.0
        %1066 = vmatpush1.msra.mxu0 %v324
        %1067 = vmatprep.subr.mxu0 0.0
        %1068 = vmatpush1.msra.mxu0 %v323
        %1069 = vmatprep.subr.mxu0 0.0
        %1070 = vmatpush2.msra.mxu0 0.0
        %1071 = vmatprep.subr.mxu0 0.0
        %1072 = vmatpush2.msra.mxu0 0.0
        %1073 = vmatprep.subr.mxu0 0.0
        %1074 = vmatpush2.msra.mxu0 0.0
        %1075 = vmatprep.subr.mxu0 0.0
        %1076 = vmatpush2.msra.mxu0 0.0
        %1077 = vmatprep.subr.mxu0 0.0
        %1078 = vmatpush2.msra.mxu0 0.0
        %1079 = vmatprep.subr.mxu0 0.0
        %1080 = vmatpush2.msra.mxu0 0.0
        %1081 = vmatprep.subr.mxu0 0.0
        %1082 = vmatpush2.msra.mxu0 0.0
        %1083 = vmatprep.subr.mxu0 0.0
        %1084 = vmatpush2.msra.mxu0 0.0
        %1085 = vmatprep.subr.mxu0 0.0
        %1086 = vmatpush2.msra.mxu0 0.0
        %1087 = vmatprep.subr.mxu0 0.0
        %1088 = vmatpush2.msra.mxu0 0.0
        %1089 = vmatprep.subr.mxu0 0.0
        %1090 = vmatpush2.msra.mxu0 0.0
        %1091 = vmatprep.subr.mxu0 0.0
        %1092 = vmatpush2.msra.mxu0 0.0
        %1093 = vmatprep.subr.mxu0 0.0
        %1094 = vmatpush2.msra.mxu0 0.0
        %1095 = vmatprep.subr.mxu0 0.0
        %1096 = vmatpush2.msra.mxu0 0.0
        %1097 = vmatprep.subr.mxu0 0.0
        %1098 = vmatpush2.msra.mxu0 0.0
        %1099 = vmatprep.subr.mxu0 0.0
        %1100 = vmatpush2.msra.mxu0 0.0
        %1101 = vmatprep.mubr.f32.mxu0 0.0
        %1102 = vmatmul.mubr.f32.gmra.mxu0 %v1035
        %v1103 = vpop.f32.mrf.mxu0
        %v1104 = vadd.f32 0.0, %v1103
        %v1105 = vpop.f32.mrf.mxu0
        %1106 = vdwg.mxu0
        %v1107 = vsel %vm683, %v742, 0
        %1109 = vmatprep.subr.mxu0 0.0
        %1110 = vmatpush1.msra.mxu0 0.0
        %1111 = vmatprep.subr.mxu0 0.0
        %1112 = vmatpush1.msra.mxu0 0.0
        %1113 = vmatprep.subr.mxu0 0.0
        %1114 = vmatpush1.msra.mxu0 0.0
        %1115 = vmatprep.subr.mxu0 0.0
        %1116 = vmatpush1.msra.mxu0 0.0
        %1117 = vmatprep.subr.mxu0 0.0
        %1118 = vmatpush1.msra.mxu0 0.0
        %1119 = vmatprep.subr.mxu0 0.0
        %1120 = vmatpush1.msra.mxu0 0.0
        %1121 = vmatprep.subr.mxu0 0.0
        %1122 = vmatpush1.msra.mxu0 0.0
        %1123 = vmatprep.subr.mxu0 0.0
        %1124 = vmatpush1.msra.mxu0 0.0
        %1125 = vmatprep.subr.mxu0 0.0
        %1126 = vmatpush1.msra.mxu0 0.0
        %1127 = vmatprep.subr.mxu0 0.0
        %1128 = vmatpush1.msra.mxu0 0.0
        %1129 = vmatprep.subr.mxu0 0.0
        %1130 = vmatpush1.msra.mxu0 0.0
        %1131 = vmatprep.subr.mxu0 0.0
        %1132 = vmatpush1.msra.mxu0 0.0
        %1133 = vmatprep.subr.mxu0 0.0
        %1134 = vmatpush1.msra.mxu0 0.0
        %1135 = vmatprep.subr.mxu0 0.0
        %1136 = vmatpush1.msra.mxu0 0.0
        %1137 = vmatprep.subr.mxu0 0.0
        %1138 = vmatpush1.msra.mxu0 %v326
        %1139 = vmatprep.subr.mxu0 0.0
        %1140 = vmatpush1.msra.mxu0 %v325
        %1141 = vmatprep.subr.mxu0 0.0
        %1142 = vmatpush2.msra.mxu0 0.0
        %1143 = vmatprep.subr.mxu0 0.0
        %1144 = vmatpush2.msra.mxu0 0.0
        %1145 = vmatprep.subr.mxu0 0.0
        %1146 = vmatpush2.msra.mxu0 0.0
        %1147 = vmatprep.subr.mxu0 0.0
        %1148 = vmatpush2.msra.mxu0 0.0
        %1149 = vmatprep.subr.mxu0 0.0
        %1150 = vmatpush2.msra.mxu0 0.0
        %1151 = vmatprep.subr.mxu0 0.0
        %1152 = vmatpush2.msra.mxu0 0.0
        %1153 = vmatprep.subr.mxu0 0.0
        %1154 = vmatpush2.msra.mxu0 0.0
        %1155 = vmatprep.subr.mxu0 0.0
        %1156 = vmatpush2.msra.mxu0 0.0
        %1157 = vmatprep.subr.mxu0 0.0
        %1158 = vmatpush2.msra.mxu0 0.0
        %1159 = vmatprep.subr.mxu0 0.0
        %1160 = vmatpush2.msra.mxu0 0.0
        %1161 = vmatprep.subr.mxu0 0.0
        %1162 = vmatpush2.msra.mxu0 0.0
        %1163 = vmatprep.subr.mxu0 0.0
        %1164 = vmatpush2.msra.mxu0 0.0
        %1165 = vmatprep.subr.mxu0 0.0
        %1166 = vmatpush2.msra.mxu0 0.0
        %1167 = vmatprep.subr.mxu0 0.0
        %1168 = vmatpush2.msra.mxu0 0.0
        %1169 = vmatprep.subr.mxu0 0.0
        %1170 = vmatpush2.msra.mxu0 0.0
        %1171 = vmatprep.subr.mxu0 0.0
        %1172 = vmatpush2.msra.mxu0 0.0
        %1173 = vmatprep.mubr.f32.mxu0 0.0
        %1174 = vmatmul.mubr.f32.gmra.mxu0 %v1107
        %v1175 = vpop.f32.mrf.mxu0
        %v1176 = vadd.f32 0.0, %v1175
        %v1177 = vpop.f32.mrf.mxu0
        %1178 = vdwg.mxu0
        %v1179 = vsel %vm683, %v744, 0
        %1181 = vmatprep.subr.mxu0 0.0
        %1182 = vmatpush1.msra.mxu0 0.0
        %1183 = vmatprep.subr.mxu0 0.0
        %1184 = vmatpush1.msra.mxu0 0.0
        %1185 = vmatprep.subr.mxu0 0.0
        %1186 = vmatpush1.msra.mxu0 0.0
        %1187 = vmatprep.subr.mxu0 0.0
        %1188 = vmatpush1.msra.mxu0 0.0
        %1189 = vmatprep.subr.mxu0 0.0
        %1190 = vmatpush1.msra.mxu0 0.0
        %1191 = vmatprep.subr.mxu0 0.0
        %1192 = vmatpush1.msra.mxu0 0.0
        %1193 = vmatprep.subr.mxu0 0.0
        %1194 = vmatpush1.msra.mxu0 0.0
        %1195 = vmatprep.subr.mxu0 0.0
        %1196 = vmatpush1.msra.mxu0 0.0
        %1197 = vmatprep.subr.mxu0 0.0
        %1198 = vmatpush1.msra.mxu0 0.0
        %1199 = vmatprep.subr.mxu0 0.0
        %1200 = vmatpush1.msra.mxu0 0.0
        %1201 = vmatprep.subr.mxu0 0.0
        %1202 = vmatpush1.msra.mxu0 0.0
        %1203 = vmatprep.subr.mxu0 0.0
        %1204 = vmatpush1.msra.mxu0 0.0
        %1205 = vmatprep.subr.mxu0 0.0
        %1206 = vmatpush1.msra.mxu0 0.0
        %1207 = vmatprep.subr.mxu0 0.0
        %1208 = vmatpush1.msra.mxu0 0.0
        %1209 = vmatprep.subr.mxu0 0.0
        %1210 = vmatpush1.msra.mxu0 %v328
        %1211 = vmatprep.subr.mxu0 0.0
        %1212 = vmatpush1.msra.mxu0 %v327
        %1213 = vmatprep.subr.mxu0 0.0
        %1214 = vmatpush2.msra.mxu0 0.0
        %1215 = vmatprep.subr.mxu0 0.0
        %1216 = vmatpush2.msra.mxu0 0.0
        %1217 = vmatprep.subr.mxu0 0.0
        %1218 = vmatpush2.msra.mxu0 0.0
        %1219 = vmatprep.subr.mxu0 0.0
        %1220 = vmatpush2.msra.mxu0 0.0
        %1221 = vmatprep.subr.mxu0 0.0
        %1222 = vmatpush2.msra.mxu0 0.0
        %1223 = vmatprep.subr.mxu0 0.0
        %1224 = vmatpush2.msra.mxu0 0.0
        %1225 = vmatprep.subr.mxu0 0.0
        %1226 = vmatpush2.msra.mxu0 0.0
        %1227 = vmatprep.subr.mxu0 0.0
        %1228 = vmatpush2.msra.mxu0 0.0
        %1229 = vmatprep.subr.mxu0 0.0
        %1230 = vmatpush2.msra.mxu0 0.0
        %1231 = vmatprep.subr.mxu0 0.0
        %1232 = vmatpush2.msra.mxu0 0.0
        %1233 = vmatprep.subr.mxu0 0.0
        %1234 = vmatpush2.msra.mxu0 0.0
        %1235 = vmatprep.subr.mxu0 0.0
        %1236 = vmatpush2.msra.mxu0 0.0
        %1237 = vmatprep.subr.mxu0 0.0
        %1238 = vmatpush2.msra.mxu0 0.0
        %1239 = vmatprep.subr.mxu0 0.0
        %1240 = vmatpush2.msra.mxu0 0.0
        %1241 = vmatprep.subr.mxu0 0.0
        %1242 = vmatpush2.msra.mxu0 0.0
        %1243 = vmatprep.subr.mxu0 0.0
        %1244 = vmatpush2.msra.mxu0 0.0
        %1245 = vmatprep.mubr.f32.mxu0 0.0
        %1246 = vmatmul.mubr.f32.gmra.mxu0 %v1179
        %v1247 = vpop.f32.mrf.mxu0
        %v1248 = vadd.f32 0.0, %v1247
        %v1249 = vpop.f32.mrf.mxu0
        %1250 = vdwg.mxu0
        %v1251 = vsel %vm683, %v746, 0
        %1253 = vmatprep.subr.mxu0 0.0
        %1254 = vmatpush1.msra.mxu0 0.0
        %1255 = vmatprep.subr.mxu0 0.0
        %1256 = vmatpush1.msra.mxu0 0.0
        %1257 = vmatprep.subr.mxu0 0.0
        %1258 = vmatpush1.msra.mxu0 0.0
        %1259 = vmatprep.subr.mxu0 0.0
        %1260 = vmatpush1.msra.mxu0 0.0
        %1261 = vmatprep.subr.mxu0 0.0
        %1262 = vmatpush1.msra.mxu0 0.0
        %1263 = vmatprep.subr.mxu0 0.0
        %1264 = vmatpush1.msra.mxu0 0.0
        %1265 = vmatprep.subr.mxu0 0.0
        %1266 = vmatpush1.msra.mxu0 0.0
        %1267 = vmatprep.subr.mxu0 0.0
        %1268 = vmatpush1.msra.mxu0 0.0
        %1269 = vmatprep.subr.mxu0 0.0
        %1270 = vmatpush1.msra.mxu0 0.0
        %1271 = vmatprep.subr.mxu0 0.0
        %1272 = vmatpush1.msra.mxu0 0.0
        %1273 = vmatprep.subr.mxu0 0.0
        %1274 = vmatpush1.msra.mxu0 0.0
        %1275 = vmatprep.subr.mxu0 0.0
        %1276 = vmatpush1.msra.mxu0 0.0
        %1277 = vmatprep.subr.mxu0 0.0
        %1278 = vmatpush1.msra.mxu0 0.0
        %1279 = vmatprep.subr.mxu0 0.0
        %1280 = vmatpush1.msra.mxu0 0.0
        %1281 = vmatprep.subr.mxu0 0.0
        %1282 = vmatpush1.msra.mxu0 %v330
        %1283 = vmatprep.subr.mxu0 0.0
        %1284 = vmatpush1.msra.mxu0 %v329
        %1285 = vmatprep.subr.mxu0 0.0
        %1286 = vmatpush2.msra.mxu0 0.0
        %1287 = vmatprep.subr.mxu0 0.0
        %1288 = vmatpush2.msra.mxu0 0.0
        %1289 = vmatprep.subr.mxu0 0.0
        %1290 = vmatpush2.msra.mxu0 0.0
        %1291 = vmatprep.subr.mxu0 0.0
        %1292 = vmatpush2.msra.mxu0 0.0
        %1293 = vmatprep.subr.mxu0 0.0
        %1294 = vmatpush2.msra.mxu0 0.0
        %1295 = vmatprep.subr.mxu0 0.0
        %1296 = vmatpush2.msra.mxu0 0.0
        %1297 = vmatprep.subr.mxu0 0.0
        %1298 = vmatpush2.msra.mxu0 0.0
        %1299 = vmatprep.subr.mxu0 0.0
        %1300 = vmatpush2.msra.mxu0 0.0
        %1301 = vmatprep.subr.mxu0 0.0
        %1302 = vmatpush2.msra.mxu0 0.0
        %1303 = vmatprep.subr.mxu0 0.0
        %1304 = vmatpush2.msra.mxu0 0.0
        %1305 = vmatprep.subr.mxu0 0.0
        %1306 = vmatpush2.msra.mxu0 0.0
        %1307 = vmatprep.subr.mxu0 0.0
        %1308 = vmatpush2.msra.mxu0 0.0
        %1309 = vmatprep.subr.mxu0 0.0
        %1310 = vmatpush2.msra.mxu0 0.0
        %1311 = vmatprep.subr.mxu0 0.0
        %1312 = vmatpush2.msra.mxu0 0.0
        %1313 = vmatprep.subr.mxu0 0.0
        %1314 = vmatpush2.msra.mxu0 0.0
        %1315 = vmatprep.subr.mxu0 0.0
        %1316 = vmatpush2.msra.mxu0 0.0
        %1317 = vmatprep.mubr.f32.mxu0 0.0
        %1318 = vmatmul.mubr.f32.gmra.mxu0 %v1251
        %v1319 = vpop.f32.mrf.mxu0
        %v1320 = vadd.f32 0.0, %v1319
        %v1321 = vpop.f32.mrf.mxu0
        %1322 = vdwg.mxu0
        %v1331 = vrot.slane %v888, 7
        %v1332 = vsel %vm667, %v1331, %v816
        %v1333 = vrot.slane %v960, 6
        %v1334 = vsel %vm669, %v1333, %v1332
        %v1335 = vrot.slane %v1032, 5
        %v1336 = vsel %vm671, %v1335, %v1334
        %v1337 = vrot.slane %v1104, 4
        %v1338 = vsel %vm673, %v1337, %v1336
        %v1339 = vrot.slane %v1176, 3
        %v1340 = vsel %vm675, %v1339, %v1338
        %v1341 = vrot.slane %v1248, 2
        %v1342 = vsel %vm677, %v1341, %v1340
        %v1343 = vrot.slane %v1320, 1
        %v1344 = vsel %vm679, %v1343, %v1342
        %1346 = vst [vmem:[%s302] sm:$0xff] %v1344
        %s1347 = sand.u32 %s151, 1
        %s1348 = scalar_lea.sflag [#allocation4], %s1347
        %s1349 = sand.u32 %s151, 1
        %s1350 = smul.addr %s1349, 8
        %s1351 = scalar_lea.vmem [#allocation7], %s1350
        %s1352 = sand.u32 %s177, 1
        %s1353 = scalar_lea.sflag [#allocation9], %s1352
        %s1354 = sand.u32 %s177, 1
        %s1355 = smul.addr %s1354, 8
        %s1356 = scalar_lea.vmem [#allocation8], %s1355
        // Predicated region
        $region49: #{tpu_custom_call.1} parent=39 // pred_check
          %p1357 = pneg %p161
        $region50: #{tpu_custom_call.1} parent=39 // pred_check_branch
          %1359 = sbr.rel (%p1357) target = $region52
        $region51: #{tpu_custom_call.1} parent=39 // pred_region
          %s1361 = ssub.s32 128, 128
          %1362 = vsyncadd %s1348, %s1361
          %s1363 = smul.addr %s28, 128
          %s1364 = scalar_lea.hbm %s5, %s1363
          %s1366 = sshll.u32 %s1351, 4
          %s1367 = int_to_ptr.vmem [resolvable:$true] %s1366
          %1369 = dma.vmem_to_hbm [thread:$0]  %s1367, 128, %s1364, %s1348
        $region52: #{tpu_custom_call.1} parent=39 // pred_fallthru
          _
        // Predicated region
        $region53: #{tpu_custom_call.1} parent=39 // pred_check
          %p1370 = pneg %p187
        $region54: #{tpu_custom_call.1} parent=39 // pred_check_branch
          %1372 = sbr.rel (%p1370) target = $region56
        $region55: #{tpu_custom_call.1} parent=39 // pred_region
          %s1374 = ssub.s32 128, 128
          %1375 = vsyncadd %s1353, %s1374
          %s1376 = smul.addr %s28, 128
          %s1377 = scalar_lea.hbm %s6, %s1376
          %s1379 = sshll.u32 %s1356, 4
          %s1380 = int_to_ptr.vmem [resolvable:$true] %s1379
          %1382 = dma.vmem_to_hbm [thread:$0]  %s1380, 128, %s1377, %s1353
        $region56: #{tpu_custom_call.1} parent=39 // pred_fallthru
          _
      $region40: #{tpu_custom_call.1} parent=5 // pred_fallthru
        _
      %p1383 = scmp.le.s32.totalorder 2, %s23
      // Predicated region
      $region57: #{tpu_custom_call.1} parent=5 // pred_check
        %p1384 = pneg %p1383
      $region58: #{tpu_custom_call.1} parent=5 // pred_check_branch
        %1386 = sbr.rel (%p1384) target = $region60
      $region59: #{tpu_custom_call.1} parent=5 // pred_region
        %s1387 = ssub.s32 %s23, 2
        // Predicated region
        $region61: #{tpu_custom_call.1} parent=59 // pred_check
          %p1388 = pneg %p167
        $region62: #{tpu_custom_call.1} parent=59 // pred_check_branch
          %1390 = sbr.rel (%p1388) target = $region64
        $region63: #{tpu_custom_call.1} parent=59 // pred_region
          %s1391 = sand.u32 %s152, 1
          %s1392 = scalar_lea.sflag [#allocation4], %s1391
          %s1393 = sand.u32 %s152, 1
          %s1394 = smul.addr %s1393, 8
          %s1395 = scalar_lea.vmem [#allocation7], %s1394
          %1396 = dma.done %s1392, 128
        $region64: #{tpu_custom_call.1} parent=59 // pred_fallthru
          _
        // Predicated region
        $region65: #{tpu_custom_call.1} parent=59 // pred_check
          %p1397 = pneg %p193
        $region66: #{tpu_custom_call.1} parent=59 // pred_check_branch
          %1399 = sbr.rel (%p1397) target = $region68
        $region67: #{tpu_custom_call.1} parent=59 // pred_region
          %s1400 = sand.u32 %s178, 1
          %s1401 = scalar_lea.sflag [#allocation9], %s1400
          %s1402 = sand.u32 %s178, 1
          %s1403 = smul.addr %s1402, 8
          %s1404 = scalar_lea.vmem [#allocation8], %s1403
          %1405 = dma.done %s1401, 128
        $region68: #{tpu_custom_call.1} parent=59 // pred_fallthru
          _
      $region60: #{tpu_custom_call.1} parent=5 // pred_fallthru
        _
    $region6: #{tpu_custom_call.1} parent=1 // loop_footer
      %s27 = sadd.s32 1, %s23
    $region7: #{tpu_custom_call.1} parent=1 // loop_footer_branch
      %22 = sbr.rel target = $region3
    $region8: #{tpu_custom_call.1} parent=1 // loop_exit
      _
    %1406 = vsyncpa [#allocation3], 1
    %s1407 = scalar_lea.sflag [#allocation3], 1
    %1408 = vsyncpa %s1407, 1
    %1409 = vsyncpa [#allocation6], 1
    %1410 = vsyncpa [#allocation4], 1
    %s1411 = scalar_lea.sflag [#allocation4], 1
    %1412 = vsyncpa %s1411, 1
    %1413 = vsyncpa [#allocation9], 1
    %s1414 = scalar_lea.sflag [#allocation9], 1
    %1415 = vsyncpa %s1414, 1

</llo_original>
